<compile_context>
chip_gen: v5e
topology: v5e:2x2
jax: 0.10.0
libtpu: 0.0.40
codegen_flags: <defaults>
</compile_context>

<pallas_src>
import jax
import jax.numpy as jnp
from jax.experimental import pallas as pl
from jax.experimental.pallas import tpu as pltpu

NDIM = 32            # Encoder(ndim=32)
D_IN = 28 * 28       # 784
D_IN_PAD = 896       # 7 * 128 — lane-aligned K for matmul 1
D_H1 = 256
D_H2 = 64


def encoder_kernel(x_ref, w1_ref, b1_ref, w2_ref, b2_ref, w3_ref, b3_ref, o_ref):
    # Layer 1: (T, 896)bf16 @ (896, 256)bf16 -> f32 acc, +bias, ReLU
    h1 = jnp.dot(x_ref[...], w1_ref[...], preferred_element_type=jnp.float32)
    h1 = jnp.maximum(h1 + b1_ref[...], 0.0)
    # Layer 2: (T, 256)bf16 @ (256, 64)bf16 -> f32 acc, +bias, ReLU
    h2 = jnp.dot(h1.astype(w2_ref.dtype), w2_ref[...],
                 preferred_element_type=jnp.float32)
    h2 = jnp.maximum(h2 + b2_ref[...], 0.0)
    # Layer 3: (T, 64)bf16 @ (64, 32)bf16 -> f32 acc, +bias
    o_ref[...] = (
        jnp.dot(h2.astype(w3_ref.dtype), w3_ref[...],
                preferred_element_type=jnp.float32)
        + b3_ref[...]
    )


def _prep_params(params):
    """Zero-pad w1's K-dim to 896 and cast weights to bf16 (biases stay f32)."""
    w1 = jnp.pad(params["w1"], ((0, D_IN_PAD - D_IN), (0, 0)))
    return dict(
        w1=w1.astype(jnp.bfloat16),
        b1=params["b1"].astype(jnp.float32),
        w2=params["w2"].astype(jnp.bfloat16),
        b2=params["b2"].astype(jnp.float32),
        w3=params["w3"].astype(jnp.bfloat16),
        b3=params["b3"].astype(jnp.float32),
    )


def _choose_tile_n(n):
    # Small batches: single grid step, padded only to sublane granularity.
    # Large batches: 512-row tiles — >=256 keeps the v6e 2x256 MXU busy and
    # amortizes per-grid-step overhead; double-buffered bf16 x tiles
    # (512*896*2B*2 ≈ 1.8 MiB) stay well under v5e's 16 MiB / v7x's 32 MiB
    # default scoped VMEM limits, so no vmem_limit_bytes override is needed.
    if n <= 512:
        return max(8, ((n + 7) // 8) * 8)
    return 512


def encoder_forward(x_nchw, params):
    """x_nchw: (N, 1, 28, 28) float32, params: dict of (in,out) weights + biases."""
    n = x_nchw.shape[0]
    x = x_nchw.reshape(n, -1).astype(jnp.float32)           # Flatten -> (N, 784)

    tile_n = _choose_tile_n(n)
    n_pad = ((n + tile_n - 1) // tile_n) * tile_n
    # One pad for both: rows to tile multiple, cols 784 -> 896 (zeros).
    x = jnp.pad(x, ((0, n_pad - n), (0, D_IN_PAD - D_IN))).astype(jnp.bfloat16)

    p = _prep_params(params)
    grid = (n_pad // tile_n,)

    flops = 2 * n_pad * (D_IN_PAD * D_H1 + D_H1 * D_H2 + D_H2 * NDIM)
    bytes_accessed = (
        n_pad * D_IN_PAD * 2                                          # x (bf16)
        + (D_IN_PAD * D_H1 + D_H1 * D_H2 + D_H2 * NDIM) * 2           # weights (bf16)
        + (D_H1 + D_H2 + NDIM) * 4                                    # biases (f32)
        + n_pad * NDIM * 4                                            # output (f32)
    )

    out = pl.pallas_call(
        encoder_kernel,
        out_shape=jax.ShapeDtypeStruct((n_pad, NDIM), jnp.float32),
        grid_spec=pltpu.PrefetchScalarGridSpec(
            num_scalar_prefetch=0,
            grid=grid,
            in_specs=[
                pl.BlockSpec((tile_n, D_IN_PAD), lambda i: (i, 0)),   # x: batch-tiled
                pl.BlockSpec((D_IN_PAD, D_H1), lambda i: (0, 0)),     # w1: VMEM-resident
                pl.BlockSpec((1, D_H1), lambda i: (0, 0)),            # b1
                pl.BlockSpec((D_H1, D_H2), lambda i: (0, 0)),         # w2
                pl.BlockSpec((1, D_H2), lambda i: (0, 0)),            # b2
                pl.BlockSpec((D_H2, NDIM), lambda i: (0, 0)),         # w3
                pl.BlockSpec((1, NDIM), lambda i: (0, 0)),            # b3
            ],
            out_specs=pl.BlockSpec((tile_n, NDIM), lambda i: (i, 0)),
        ),
        compiler_params=pltpu.CompilerParams(
            dimension_semantics=("parallel",),   # shard batch across v7x's 2 TCs
        ),
        cost_estimate=pl.CostEstimate(
            flops=flops, transcendentals=0, bytes_accessed=bytes_accessed),
    )(x, p["w1"], p["b1"], p["w2"], p["b2"], p["w3"], p["b3"])
    return out[:n]


def init_params(key):
    """Deterministic synthetic init (PyTorch-style U(-1/sqrt(fan_in), 1/sqrt(fan_in)))."""
    keys = jax.random.split(key, 6)

    def lin(kw, kb, fan_in, fan_out):
        bound = 1.0 / jnp.sqrt(fan_in)
        w = jax.random.uniform(kw, (fan_in, fan_out), jnp.float32, -bound, bound)
        b = jax.random.uniform(kb, (1, fan_out), jnp.float32, -bound, bound)
        return w, b

    w1, b1 = lin(keys[0], keys[1], D_IN, D_H1)
    w2, b2 = lin(keys[2], keys[3], D_H1, D_H2)
    w3, b3 = lin(keys[4], keys[5], D_H2, NDIM)
    return dict(w1=w1, b1=b1, w2=w2, b2=b2, w3=w3, b3=b3)


def encoder_ref_f32(x_nchw, params):
    """Pure-JAX f32 reference matching torch semantics."""
    x = x_nchw.reshape(x_nchw.shape[0], -1).astype(jnp.float32)
    h1 = jnp.maximum(x @ params["w1"] + params["b1"], 0.0)
    h2 = jnp.maximum(h1 @ params["w2"] + params["b2"], 0.0)
    return h2 @ params["w3"] + params["b3"]


def encoder_ref_bf16(x_nchw, params):
    """Pure-JAX reference mirroring the kernel's bf16-input / f32-accumulate math."""
    x = x_nchw.reshape(x_nchw.shape[0], -1).astype(jnp.bfloat16)
    w1 = params["w1"].astype(jnp.bfloat16)
    w2 = params["w2"].astype(jnp.bfloat16)
    w3 = params["w3"].astype(jnp.bfloat16)
    h1 = jnp.maximum(
        jnp.dot(x, w1, preferred_element_type=jnp.float32) + params["b1"], 0.0)
    h2 = jnp.maximum(
        jnp.dot(h1.astype(jnp.bfloat16), w2,
                preferred_element_type=jnp.float32) + params["b2"], 0.0)
    return (jnp.dot(h2.astype(jnp.bfloat16), w3,
                    preferred_element_type=jnp.float32) + params["b3"])


if __name__ == "__main__":
    key = jax.random.PRNGKey(0)
    k_param, k_x, k_x2 = jax.random.split(key, 3)

    params = init_params(k_param)

    # --- small-batch path (single grid step, matches original spec test) ---
    x = jax.random.normal(k_x, (2, 1, 28, 28), dtype=jnp.float32)
    out = jax.block_until_ready(encoder_forward(x, params))
    assert out.shape == (2, NDIM), out.shape
    ref_bf16 = encoder_ref_bf16(x, params)
    ref_f32 = encoder_ref_f32(x, params)
    assert jnp.allclose(out, ref_bf16, atol=2e-3, rtol=2e-3), "mismatch vs bf16 ref"
    assert jnp.allclose(out, ref_f32, atol=5e-2, rtol=5e-2), "mismatch vs f32 ref"

    # --- multi-tile path (exercises the batch grid + row padding/slicing) ---
    x_big = jax.random.normal(k_x2, (640, 1, 28, 28), dtype=jnp.float32)
    out_big = jax.block_until_ready(encoder_forward(x_big, params))
    assert out_big.shape == (640, NDIM), out_big.shape
    ref_big = encoder_ref_bf16(x_big, params)
    assert jnp.allclose(out_big, ref_big, atol=2e-3, rtol=2e-3), "mismatch (tiled)"

    print("KERNEL_OK")
</pallas_src>

<mosaic_0001>
module attributes {stable_mosaic.version = 11 : i64} {
  func.func @encoder_kernel(%arg0: i32, %arg1: memref<8x896xbf16, #tpu.memory_space<vmem>>, %arg2: memref<896x256xbf16, #tpu.memory_space<vmem>>, %arg3: memref<1x256xf32, #tpu.memory_space<vmem>>, %arg4: memref<256x64xbf16, #tpu.memory_space<vmem>>, %arg5: memref<1x64xf32, #tpu.memory_space<vmem>>, %arg6: memref<64x32xbf16, #tpu.memory_space<vmem>>, %arg7: memref<1x32xf32, #tpu.memory_space<vmem>>, %arg8: memref<8x32xf32, #tpu.memory_space<vmem>>) attributes {dimension_semantics = [#tpu.dimension_semantics<parallel>], iteration_bounds = array<i64: 1>, scalar_prefetch = 0 : i64, scratch_operands = 0 : i64, tpu.core_type = #tpu.core_type<tc>, window_params = [{transform_indices = @transform_0, window_bounds = array<i64: 8, 896>}, {pipeline_mode = #tpu.pipeline_mode<synchronous>, transform_indices = @transform_1, window_bounds = array<i64: 896, 256>}, {pipeline_mode = #tpu.pipeline_mode<synchronous>, transform_indices = @transform_2, window_bounds = array<i64: 1, 256>}, {pipeline_mode = #tpu.pipeline_mode<synchronous>, transform_indices = @transform_3, window_bounds = array<i64: 256, 64>}, {pipeline_mode = #tpu.pipeline_mode<synchronous>, transform_indices = @transform_4, window_bounds = array<i64: 1, 64>}, {pipeline_mode = #tpu.pipeline_mode<synchronous>, transform_indices = @transform_5, window_bounds = array<i64: 64, 32>}, {pipeline_mode = #tpu.pipeline_mode<synchronous>, transform_indices = @transform_6, window_bounds = array<i64: 1, 32>}, {transform_indices = @transform_7, window_bounds = array<i64: 8, 32>}]} {
    %c0 = arith.constant 0 : index
    %c0_0 = arith.constant 0 : index
    %0 = vector.load %arg1[%c0, %c0_0] : memref<8x896xbf16, #tpu.memory_space<vmem>>, vector<8x896xbf16>
    %c0_1 = arith.constant 0 : index
    %c0_2 = arith.constant 0 : index
    %1 = vector.load %arg2[%c0_1, %c0_2] : memref<896x256xbf16, #tpu.memory_space<vmem>>, vector<896x256xbf16>
    %cst = arith.constant dense<0.000000e+00> : vector<8x256xf32>
    %2 = tpu.matmul %0, %1, %cst {dimension_numbers = #tpu.dot_dimension_numbers<[1], [0], [0], [1], [0, 0, 1, 1], [], []>} : vector<8x896xbf16>, vector<896x256xbf16>, vector<8x256xf32> -> vector<8x256xf32>
    %c0_3 = arith.constant 0 : index
    %c0_4 = arith.constant 0 : index
    %3 = vector.load %arg3[%c0_3, %c0_4] : memref<1x256xf32, #tpu.memory_space<vmem>>, vector<1x256xf32>
    %4 = vector.broadcast %3 : vector<1x256xf32> to vector<8x256xf32>
    %5 = arith.addf %2, %4 : vector<8x256xf32>
    %cst_5 = arith.constant 0.000000e+00 : f32
    %6 = vector.broadcast %cst_5 : f32 to vector<8x256xf32>
    %7 = arith.maximumf %5, %6 : vector<8x256xf32>
    %8 = arith.truncf %7 : vector<8x256xf32> to vector<8x256xbf16>
    %c0_6 = arith.constant 0 : index
    %c0_7 = arith.constant 0 : index
    %9 = vector.load %arg4[%c0_6, %c0_7] : memref<256x64xbf16, #tpu.memory_space<vmem>>, vector<256x64xbf16>
    %cst_8 = arith.constant dense<0.000000e+00> : vector<8x64xf32>
    %10 = tpu.matmul %8, %9, %cst_8 {dimension_numbers = #tpu.dot_dimension_numbers<[1], [0], [0], [1], [0, 0, 1, 1], [], []>} : vector<8x256xbf16>, vector<256x64xbf16>, vector<8x64xf32> -> vector<8x64xf32>
    %c0_9 = arith.constant 0 : index
    %c0_10 = arith.constant 0 : index
    %11 = vector.load %arg5[%c0_9, %c0_10] : memref<1x64xf32, #tpu.memory_space<vmem>>, vector<1x64xf32>
    %12 = vector.broadcast %11 : vector<1x64xf32> to vector<8x64xf32>
    %13 = arith.addf %10, %12 : vector<8x64xf32>
    %cst_11 = arith.constant 0.000000e+00 : f32
    %14 = vector.broadcast %cst_11 : f32 to vector<8x64xf32>
    %15 = arith.maximumf %13, %14 : vector<8x64xf32>
    %16 = arith.truncf %15 : vector<8x64xf32> to vector<8x64xbf16>
    %c0_12 = arith.constant 0 : index
    %c0_13 = arith.constant 0 : index
    %17 = vector.load %arg6[%c0_12, %c0_13] : memref<64x32xbf16, #tpu.memory_space<vmem>>, vector<64x32xbf16>
    %cst_14 = arith.constant dense<0.000000e+00> : vector<8x32xf32>
    %18 = tpu.matmul %16, %17, %cst_14 {dimension_numbers = #tpu.dot_dimension_numbers<[1], [0], [0], [1], [0, 0, 1, 1], [], []>} : vector<8x64xbf16>, vector<64x32xbf16>, vector<8x32xf32> -> vector<8x32xf32>
    %c0_15 = arith.constant 0 : index
    %c0_16 = arith.constant 0 : index
    %19 = vector.load %arg7[%c0_15, %c0_16] : memref<1x32xf32, #tpu.memory_space<vmem>>, vector<1x32xf32>
    %20 = vector.broadcast %19 : vector<1x32xf32> to vector<8x32xf32>
    %21 = arith.addf %18, %20 : vector<8x32xf32>
    %c0_17 = arith.constant 0 : index
    %c0_18 = arith.constant 0 : index
    %22 = vector.load %arg8[%c0_17, %c0_18] : memref<8x32xf32, #tpu.memory_space<vmem>>, vector<8x32xf32>
    tpu.vector_store %arg8[%c0_17, %c0_18], %21 {strides = array<i32>} : memref<8x32xf32, #tpu.memory_space<vmem>>, vector<8x32xf32>,
    return
  }
  func.func @transform_0(%arg0: i32) -> (i32, i32) {
    %c0_i32 = arith.constant 0 : i32
    %c0_i32_0 = arith.constant 0 : i32
    return %arg0, %c0_i32 : i32, i32
  }
  func.func @transform_1(%arg0: i32) -> (i32, i32) {
    %c0_i32 = arith.constant 0 : i32
    %c0_i32_0 = arith.constant 0 : i32
    %c0_i32_1 = arith.constant 0 : i32
    return %c0_i32, %c0_i32_0 : i32, i32
  }
  func.func @transform_2(%arg0: i32) -> (i32, i32) {
    %c0_i32 = arith.constant 0 : i32
    %c0_i32_0 = arith.constant 0 : i32
    %c0_i32_1 = arith.constant 0 : i32
    return %c0_i32, %c0_i32_0 : i32, i32
  }
  func.func @transform_3(%arg0: i32) -> (i32, i32) {
    %c0_i32 = arith.constant 0 : i32
    %c0_i32_0 = arith.constant 0 : i32
    %c0_i32_1 = arith.constant 0 : i32
    return %c0_i32, %c0_i32_0 : i32, i32
  }
  func.func @transform_4(%arg0: i32) -> (i32, i32) {
    %c0_i32 = arith.constant 0 : i32
    %c0_i32_0 = arith.constant 0 : i32
    %c0_i32_1 = arith.constant 0 : i32
    return %c0_i32, %c0_i32_0 : i32, i32
  }
  func.func @transform_5(%arg0: i32) -> (i32, i32) {
    %c0_i32 = arith.constant 0 : i32
    %c0_i32_0 = arith.constant 0 : i32
    %c0_i32_1 = arith.constant 0 : i32
    return %c0_i32, %c0_i32_0 : i32, i32
  }
  func.func @transform_6(%arg0: i32) -> (i32, i32) {
    %c0_i32 = arith.constant 0 : i32
    %c0_i32_0 = arith.constant 0 : i32
    %c0_i32_1 = arith.constant 0 : i32
    return %c0_i32, %c0_i32_0 : i32, i32
  }
  func.func @transform_7(%arg0: i32) -> (i32, i32) {
    %c0_i32 = arith.constant 0 : i32
    %c0_i32_0 = arith.constant 0 : i32
    return %arg0, %c0_i32 : i32, i32
  }
}

</mosaic_0001>

<llo_original>
// kernel: tpu_custom_call.1
$region0: #{tpu_custom_call.1}
  #allocation0 [shape = 'u32[]', space=smem, size = 0x4, offset = 0x4, fixed_abs, tag = 'smem constant byte address 0x4 - core index']
  #allocation1 [shape = 'u32[72,128]{1,0:T(1,128)}', space=vmem, size = 0x9000, scoped, tag = 'internal scratch']
  %s0 = inlined_call_operand.vmem [shape: bf16[8,896], index: 0, kind: input, shape index: {}]
  %s1 = inlined_call_operand.hbm [shape: bf16[896,256], index: 1, kind: input, shape index: {}]
  %s2 = inlined_call_operand.vmem [shape: f32[1,256], index: 2, kind: input, shape index: {}]
  %s3 = inlined_call_operand.vmem [shape: bf16[256,64], index: 3, kind: input, shape index: {}]
  %s4 = inlined_call_operand.vmem [shape: f32[1,64], index: 4, kind: input, shape index: {}]
  %s5 = inlined_call_operand.vmem [shape: bf16[64,32], index: 5, kind: input, shape index: {}]
  %s6 = inlined_call_operand.vmem [shape: f32[1,32], index: 6, kind: input, shape index: {}]
  %s7 = inlined_call_operand.hbm [shape: f32[8,32], index: 7, kind: output, shape index: {}]
  %s8 = sld [smem:[#allocation0]]
  $region42: #{tpu_custom_call.1} parent=0
    _
  %s10 = ssub.s32 1, %s8
  %s11 = scalar_select 0, %s10, %s8
  $region1: #{tpu_custom_call.1} parent=0
    #allocation2 [shape = 'u8[458752]{0}', space=vmem, size = 0x70000, scoped, tag = 'input window, operand 1, single buffered']
    #allocation3 [shape = 's32[1]{0}', space=sflag, size = 0x4, scoped, tag = 'scoped memory for tpu_custom_call.1']
    #allocation4 [shape = 's32[1]{0}', space=sflag, size = 0x4, scoped, tag = 'scoped memory for tpu_custom_call.1']
    #allocation5 [shape = 'u8[4096]{0}', space=vmem, size = 0x1000, scoped, tag = 'output window, operand 0, single buffered']
    %12 = vsyncpa [#allocation3], 0
    %13 = vsyncpa [#allocation4], 0
    // Predicated region
    $region2: #{tpu_custom_call.1} parent=1 // pred_check
      _
    $region3: #{tpu_custom_call.1} parent=1 // pred_check_branch
      %15 = sbr.rel (0) target = $region5
    $region4: #{tpu_custom_call.1} parent=1 // pred_region
      _
    $region5: #{tpu_custom_call.1} parent=1 // pred_fallthru
      _
    // Predicated region
    $region6: #{tpu_custom_call.1} parent=1 // pred_check
      _
    $region7: #{tpu_custom_call.1} parent=1 // pred_check_branch
      %17 = sbr.rel (0) target = $region9
    $region8: #{tpu_custom_call.1} parent=1 // pred_region
      %19 = vsyncadd [#allocation3], 0
      %s20 = sshll.u32 %s1, 4
      %s21 = int_to_ptr.hbm [resolvable:$true] %s20
      %s22 = sshll.u32 [#allocation2], 4
      %s23 = int_to_ptr.vmem [resolvable:$true] %s22
      %28 = dma.hbm_to_vmem [thread:$0]  %s21, 14336, %s23, [#allocation3], 128, 128, 8
    $region9: #{tpu_custom_call.1} parent=1 // pred_fallthru
      _
    // Predicated region
    $region10: #{tpu_custom_call.1} parent=1 // pred_check
      _
    $region11: #{tpu_custom_call.1} parent=1 // pred_check_branch
      %30 = sbr.rel (0) target = $region13
    $region12: #{tpu_custom_call.1} parent=1 // pred_region
      _
    $region13: #{tpu_custom_call.1} parent=1 // pred_fallthru
      _
    // Predicated region
    $region14: #{tpu_custom_call.1} parent=1 // pred_check
      _
    $region15: #{tpu_custom_call.1} parent=1 // pred_check_branch
      %32 = sbr.rel (0) target = $region17
    $region16: #{tpu_custom_call.1} parent=1 // pred_region
      _
    $region17: #{tpu_custom_call.1} parent=1 // pred_fallthru
      _
    // Predicated region
    $region18: #{tpu_custom_call.1} parent=1 // pred_check
      _
    $region19: #{tpu_custom_call.1} parent=1 // pred_check_branch
      %34 = sbr.rel (0) target = $region21
    $region20: #{tpu_custom_call.1} parent=1 // pred_region
      _
    $region21: #{tpu_custom_call.1} parent=1 // pred_fallthru
      _
    // Predicated region
    $region22: #{tpu_custom_call.1} parent=1 // pred_check
      _
    $region23: #{tpu_custom_call.1} parent=1 // pred_check_branch
      %36 = sbr.rel (0) target = $region25
    $region24: #{tpu_custom_call.1} parent=1 // pred_region
      _
    $region25: #{tpu_custom_call.1} parent=1 // pred_fallthru
      _
    // Predicated region
    $region26: #{tpu_custom_call.1} parent=1 // pred_check
      _
    $region27: #{tpu_custom_call.1} parent=1 // pred_check_branch
      %38 = sbr.rel (0) target = $region29
    $region28: #{tpu_custom_call.1} parent=1 // pred_region
      _
    $region29: #{tpu_custom_call.1} parent=1 // pred_fallthru
      _
    // Predicated region
    $region30: #{tpu_custom_call.1} parent=1 // pred_check
      _
    $region31: #{tpu_custom_call.1} parent=1 // pred_check_branch
      %40 = sbr.rel (0) target = $region33
    $region32: #{tpu_custom_call.1} parent=1 // pred_region
      %42 = dma.done [#allocation3], 14336
    $region33: #{tpu_custom_call.1} parent=1 // pred_fallthru
      _
    %v44 = vld [vmem:[%s0] sm:$0xff]
    %v45 = vld [vmem:[%s0 + $0x8] sm:$0xff]
    %v46 = vld [vmem:[%s0 + $0x10] sm:$0xff]
    %v47 = vld [vmem:[%s0 + $0x18] sm:$0xf]
    %v48 = vld [vmem:[#allocation2] sm:$0xff]
    %v49 = vld [vmem:[#allocation2 + $0x8] sm:$0xff]
    %v50 = vld [vmem:[#allocation2 + $0x10] sm:$0xff]
    %v51 = vld [vmem:[#allocation2 + $0x18] sm:$0xff]
    %v52 = vld [vmem:[#allocation2 + $0x20] sm:$0xff]
    %v53 = vld [vmem:[#allocation2 + $0x28] sm:$0xff]
    %v54 = vld [vmem:[#allocation2 + $0x30] sm:$0xff]
    %v55 = vld [vmem:[#allocation2 + $0x38] sm:$0xff]
    %v56 = vld [vmem:[#allocation2 + $0x40] sm:$0xff]
    %v57 = vld [vmem:[#allocation2 + $0x48] sm:$0xff]
    %v58 = vld [vmem:[#allocation2 + $0x50] sm:$0xff]
    %v59 = vld [vmem:[#allocation2 + $0x58] sm:$0xff]
    %v60 = vld [vmem:[#allocation2 + $0x60] sm:$0xff]
    %v61 = vld [vmem:[#allocation2 + $0x68] sm:$0xff]
    %v62 = vld [vmem:[#allocation2 + $0x70] sm:$0xff]
    %v63 = vld [vmem:[#allocation2 + $0x78] sm:$0xff]
    %v64 = vld [vmem:[#allocation2 + $0x80] sm:$0xff]
    %v65 = vld [vmem:[#allocation2 + $0x88] sm:$0xff]
    %v66 = vld [vmem:[#allocation2 + $0x90] sm:$0xff]
    %v67 = vld [vmem:[#allocation2 + $0x98] sm:$0xff]
    %v68 = vld [vmem:[#allocation2 + $0xa0] sm:$0xff]
    %v69 = vld [vmem:[#allocation2 + $0xa8] sm:$0xff]
    %v70 = vld [vmem:[#allocation2 + $0xb0] sm:$0xff]
    %v71 = vld [vmem:[#allocation2 + $0xb8] sm:$0xff]
    %v72 = vld [vmem:[#allocation2 + $0xc0] sm:$0xff]
    %v73 = vld [vmem:[#allocation2 + $0xc8] sm:$0xff]
    %v74 = vld [vmem:[#allocation2 + $0xd0] sm:$0xff]
    %v75 = vld [vmem:[#allocation2 + $0xd8] sm:$0xff]
    %v76 = vld [vmem:[#allocation2 + $0xe0] sm:$0xff]
    %v77 = vld [vmem:[#allocation2 + $0xe8] sm:$0xff]
    %v78 = vld [vmem:[#allocation2 + $0xf0] sm:$0xff]
    %v79 = vld [vmem:[#allocation2 + $0xf8] sm:$0xff]
    %v80 = vld [vmem:[#allocation2 + $0x100] sm:$0xff]
    %v81 = vld [vmem:[#allocation2 + $0x108] sm:$0xff]
    %v82 = vld [vmem:[#allocation2 + $0x110] sm:$0xff]
    %v83 = vld [vmem:[#allocation2 + $0x118] sm:$0xff]
    %v84 = vld [vmem:[#allocation2 + $0x120] sm:$0xff]
    %v85 = vld [vmem:[#allocation2 + $0x128] sm:$0xff]
    %v86 = vld [vmem:[#allocation2 + $0x130] sm:$0xff]
    %v87 = vld [vmem:[#allocation2 + $0x138] sm:$0xff]
    %v88 = vld [vmem:[#allocation2 + $0x140] sm:$0xff]
    %v89 = vld [vmem:[#allocation2 + $0x148] sm:$0xff]
    %v90 = vld [vmem:[#allocation2 + $0x150] sm:$0xff]
    %v91 = vld [vmem:[#allocation2 + $0x158] sm:$0xff]
    %v92 = vld [vmem:[#allocation2 + $0x160] sm:$0xff]
    %v93 = vld [vmem:[#allocation2 + $0x168] sm:$0xff]
    %v94 = vld [vmem:[#allocation2 + $0x170] sm:$0xff]
    %v95 = vld [vmem:[#allocation2 + $0x178] sm:$0xff]
    %v96 = vld [vmem:[#allocation2 + $0x180] sm:$0xff]
    %v97 = vld [vmem:[#allocation2 + $0x188] sm:$0xff]
    %v98 = vld [vmem:[#allocation2 + $0x190] sm:$0xff]
    %v99 = vld [vmem:[#allocation2 + $0x198] sm:$0xff]
    %v100 = vld [vmem:[#allocation2 + $0x1a0] sm:$0xff]
    %v101 = vld [vmem:[#allocation2 + $0x1a8] sm:$0xff]
    %v102 = vld [vmem:[#allocation2 + $0x1b0] sm:$0xff]
    %v103 = vld [vmem:[#allocation2 + $0x1b8] sm:$0xff]
    %v104 = vld [vmem:[#allocation2 + $0x1c0] sm:$0xff]
    %v105 = vld [vmem:[#allocation2 + $0x1c8] sm:$0xff]
    %v106 = vld [vmem:[#allocation2 + $0x1d0] sm:$0xff]
    %v107 = vld [vmem:[#allocation2 + $0x1d8] sm:$0xff]
    %v108 = vld [vmem:[#allocation2 + $0x1e0] sm:$0xff]
    %v109 = vld [vmem:[#allocation2 + $0x1e8] sm:$0xff]
    %v110 = vld [vmem:[#allocation2 + $0x1f0] sm:$0xff]
    %v111 = vld [vmem:[#allocation2 + $0x1f8] sm:$0xff]
    %v112 = vld [vmem:[#allocation2 + $0x200] sm:$0xff]
    %v113 = vld [vmem:[#allocation2 + $0x208] sm:$0xff]
    %v114 = vld [vmem:[#allocation2 + $0x210] sm:$0xff]
    %v115 = vld [vmem:[#allocation2 + $0x218] sm:$0xff]
    %v116 = vld [vmem:[#allocation2 + $0x220] sm:$0xff]
    %v117 = vld [vmem:[#allocation2 + $0x228] sm:$0xff]
    %v118 = vld [vmem:[#allocation2 + $0x230] sm:$0xff]
    %v119 = vld [vmem:[#allocation2 + $0x238] sm:$0xff]
    %v120 = vld [vmem:[#allocation2 + $0x240] sm:$0xff]
    %v121 = vld [vmem:[#allocation2 + $0x248] sm:$0xff]
    %v122 = vld [vmem:[#allocation2 + $0x250] sm:$0xff]
    %v123 = vld [vmem:[#allocation2 + $0x258] sm:$0xff]
    %v124 = vld [vmem:[#allocation2 + $0x260] sm:$0xff]
    %v125 = vld [vmem:[#allocation2 + $0x268] sm:$0xff]
    %v126 = vld [vmem:[#allocation2 + $0x270] sm:$0xff]
    %v127 = vld [vmem:[#allocation2 + $0x278] sm:$0xff]
    %v128 = vld [vmem:[#allocation2 + $0x280] sm:$0xff]
    %v129 = vld [vmem:[#allocation2 + $0x288] sm:$0xff]
    %v130 = vld [vmem:[#allocation2 + $0x290] sm:$0xff]
    %v131 = vld [vmem:[#allocation2 + $0x298] sm:$0xff]
    %v132 = vld [vmem:[#allocation2 + $0x2a0] sm:$0xff]
    %v133 = vld [vmem:[#allocation2 + $0x2a8] sm:$0xff]
    %v134 = vld [vmem:[#allocation2 + $0x2b0] sm:$0xff]
    %v135 = vld [vmem:[#allocation2 + $0x2b8] sm:$0xff]
    %v136 = vld [vmem:[#allocation2 + $0x2c0] sm:$0xff]
    %v137 = vld [vmem:[#allocation2 + $0x2c8] sm:$0xff]
    %v138 = vld [vmem:[#allocation2 + $0x2d0] sm:$0xff]
    %v139 = vld [vmem:[#allocation2 + $0x2d8] sm:$0xff]
    %v140 = vld [vmem:[#allocation2 + $0x2e0] sm:$0xff]
    %v141 = vld [vmem:[#allocation2 + $0x2e8] sm:$0xff]
    %v142 = vld [vmem:[#allocation2 + $0x2f0] sm:$0xff]
    %v143 = vld [vmem:[#allocation2 + $0x2f8] sm:$0xff]
    %v144 = vld [vmem:[#allocation2 + $0x300] sm:$0xff]
    %v145 = vld [vmem:[#allocation2 + $0x308] sm:$0xff]
    %v146 = vld [vmem:[#allocation2 + $0x310] sm:$0xff]
    %v147 = vld [vmem:[#allocation2 + $0x318] sm:$0xff]
    %v148 = vld [vmem:[#allocation2 + $0x320] sm:$0xff]
    %v149 = vld [vmem:[#allocation2 + $0x328] sm:$0xff]
    %v150 = vld [vmem:[#allocation2 + $0x330] sm:$0xff]
    %v151 = vld [vmem:[#allocation2 + $0x338] sm:$0xff]
    %v152 = vld [vmem:[#allocation2 + $0x340] sm:$0xff]
    %v153 = vld [vmem:[#allocation2 + $0x348] sm:$0xff]
    %v154 = vld [vmem:[#allocation2 + $0x350] sm:$0xff]
    %v155 = vld [vmem:[#allocation2 + $0x358] sm:$0xff]
    %v156 = vld [vmem:[#allocation2 + $0x360] sm:$0xff]
    %v157 = vld [vmem:[#allocation2 + $0x368] sm:$0xff]
    %v158 = vld [vmem:[#allocation2 + $0x370] sm:$0xff]
    %v159 = vld [vmem:[#allocation2 + $0x378] sm:$0xff]
    %v160 = vld [vmem:[%s2] sm:$0x3]
    %v162 = vperm.slane %v160, 0
    %v163 = vperm.slane %v160, 1
    %v170 = vunpack.c.l.b16 %v44
    %v171 = vunpack.c.h.b16 %v44
    %v172 = vunpack.c.l.b16 %v45
    %v173 = vunpack.c.h.b16 %v45
    %v174 = vunpack.c.l.b16 %v46
    %v175 = vunpack.c.h.b16 %v46
    %v176 = vunpack.c.l.b16 %v47
    %v177 = vpack.c.b16 %v170, %v170
    %v178 = vpack.c.b16 %v171, %v171
    %v179 = vpack.c.b16 %v172, %v172
    %v180 = vpack.c.b16 %v173, %v173
    %v181 = vpack.c.b16 %v174, %v174
    %v182 = vpack.c.b16 %v175, %v175
    %v183 = vpack.c.b16 %v176, %v176
    %v303 = vunpack.c.l.b16 %v48
    %v304 = vunpack.c.h.b16 %v48
    %v305 = vunpack.c.l.b16 %v49
    %v306 = vunpack.c.h.b16 %v49
    %v307 = vunpack.c.l.b16 %v50
    %v308 = vunpack.c.h.b16 %v50
    %v309 = vunpack.c.l.b16 %v51
    %v310 = vunpack.c.h.b16 %v51
    %v311 = vunpack.c.l.b16 %v52
    %v312 = vunpack.c.h.b16 %v52
    %v313 = vunpack.c.l.b16 %v53
    %v314 = vunpack.c.h.b16 %v53
    %v315 = vunpack.c.l.b16 %v54
    %v316 = vunpack.c.h.b16 %v54
    %v317 = vunpack.c.l.b16 %v55
    %v318 = vunpack.c.h.b16 %v55
    %v319 = vunpack.c.l.b16 %v56
    %v320 = vunpack.c.h.b16 %v56
    %v321 = vunpack.c.l.b16 %v57
    %v322 = vunpack.c.h.b16 %v57
    %v323 = vunpack.c.l.b16 %v58
    %v324 = vunpack.c.h.b16 %v58
    %v325 = vunpack.c.l.b16 %v59
    %v326 = vunpack.c.h.b16 %v59
    %v327 = vunpack.c.l.b16 %v60
    %v328 = vunpack.c.h.b16 %v60
    %v329 = vunpack.c.l.b16 %v61
    %v330 = vunpack.c.h.b16 %v61
    %v331 = vunpack.c.l.b16 %v62
    %v332 = vunpack.c.h.b16 %v62
    %v333 = vunpack.c.l.b16 %v63
    %v334 = vunpack.c.h.b16 %v63
    %v335 = vunpack.c.l.b16 %v64
    %v336 = vunpack.c.h.b16 %v64
    %v337 = vunpack.c.l.b16 %v65
    %v338 = vunpack.c.h.b16 %v65
    %v339 = vunpack.c.l.b16 %v66
    %v340 = vunpack.c.h.b16 %v66
    %v341 = vunpack.c.l.b16 %v67
    %v342 = vunpack.c.h.b16 %v67
    %v343 = vunpack.c.l.b16 %v68
    %v344 = vunpack.c.h.b16 %v68
    %v345 = vunpack.c.l.b16 %v69
    %v346 = vunpack.c.h.b16 %v69
    %v347 = vunpack.c.l.b16 %v70
    %v348 = vunpack.c.h.b16 %v70
    %v349 = vunpack.c.l.b16 %v71
    %v350 = vunpack.c.h.b16 %v71
    %v351 = vunpack.c.l.b16 %v72
    %v352 = vunpack.c.h.b16 %v72
    %v353 = vunpack.c.l.b16 %v73
    %v354 = vunpack.c.h.b16 %v73
    %v355 = vunpack.c.l.b16 %v74
    %v356 = vunpack.c.h.b16 %v74
    %v357 = vunpack.c.l.b16 %v75
    %v358 = vunpack.c.h.b16 %v75
    %v359 = vunpack.c.l.b16 %v76
    %v360 = vunpack.c.h.b16 %v76
    %v361 = vunpack.c.l.b16 %v77
    %v362 = vunpack.c.h.b16 %v77
    %v363 = vunpack.c.l.b16 %v78
    %v364 = vunpack.c.h.b16 %v78
    %v365 = vunpack.c.l.b16 %v79
    %v366 = vunpack.c.h.b16 %v79
    %v367 = vunpack.c.l.b16 %v80
    %v368 = vunpack.c.h.b16 %v80
    %v369 = vunpack.c.l.b16 %v81
    %v370 = vunpack.c.h.b16 %v81
    %v371 = vunpack.c.l.b16 %v82
    %v372 = vunpack.c.h.b16 %v82
    %v373 = vunpack.c.l.b16 %v83
    %v374 = vunpack.c.h.b16 %v83
    %v375 = vunpack.c.l.b16 %v84
    %v376 = vunpack.c.h.b16 %v84
    %v377 = vunpack.c.l.b16 %v85
    %v378 = vunpack.c.h.b16 %v85
    %v379 = vunpack.c.l.b16 %v86
    %v380 = vunpack.c.h.b16 %v86
    %v381 = vunpack.c.l.b16 %v87
    %v382 = vunpack.c.h.b16 %v87
    %v383 = vunpack.c.l.b16 %v88
    %v384 = vunpack.c.h.b16 %v88
    %v385 = vunpack.c.l.b16 %v89
    %v386 = vunpack.c.h.b16 %v89
    %v387 = vunpack.c.l.b16 %v90
    %v388 = vunpack.c.h.b16 %v90
    %v389 = vunpack.c.l.b16 %v91
    %v390 = vunpack.c.h.b16 %v91
    %v391 = vunpack.c.l.b16 %v92
    %v392 = vunpack.c.h.b16 %v92
    %v393 = vunpack.c.l.b16 %v93
    %v394 = vunpack.c.h.b16 %v93
    %v395 = vunpack.c.l.b16 %v94
    %v396 = vunpack.c.h.b16 %v94
    %v397 = vunpack.c.l.b16 %v95
    %v398 = vunpack.c.h.b16 %v95
    %v399 = vunpack.c.l.b16 %v96
    %v400 = vunpack.c.h.b16 %v96
    %v401 = vunpack.c.l.b16 %v97
    %v402 = vunpack.c.h.b16 %v97
    %v403 = vunpack.c.l.b16 %v98
    %v404 = vunpack.c.h.b16 %v98
    %v405 = vunpack.c.l.b16 %v99
    %v406 = vunpack.c.h.b16 %v99
    %v407 = vunpack.c.l.b16 %v100
    %v408 = vunpack.c.h.b16 %v100
    %v409 = vunpack.c.l.b16 %v101
    %v410 = vunpack.c.h.b16 %v101
    %v411 = vunpack.c.l.b16 %v102
    %v412 = vunpack.c.h.b16 %v102
    %v413 = vunpack.c.l.b16 %v103
    %v414 = vunpack.c.h.b16 %v103
    %v415 = vunpack.c.l.b16 %v104
    %v416 = vunpack.c.h.b16 %v104
    %v417 = vunpack.c.l.b16 %v105
    %v418 = vunpack.c.h.b16 %v105
    %v419 = vunpack.c.l.b16 %v106
    %v420 = vunpack.c.h.b16 %v106
    %v421 = vunpack.c.l.b16 %v107
    %v422 = vunpack.c.h.b16 %v107
    %v423 = vunpack.c.l.b16 %v108
    %v424 = vunpack.c.h.b16 %v108
    %v425 = vunpack.c.l.b16 %v109
    %v426 = vunpack.c.h.b16 %v109
    %v427 = vunpack.c.l.b16 %v110
    %v428 = vunpack.c.h.b16 %v110
    %v429 = vunpack.c.l.b16 %v111
    %v430 = vunpack.c.h.b16 %v111
    %v431 = vunpack.c.l.b16 %v112
    %v432 = vunpack.c.h.b16 %v112
    %v433 = vunpack.c.l.b16 %v113
    %v434 = vunpack.c.h.b16 %v113
    %v435 = vunpack.c.l.b16 %v114
    %v436 = vunpack.c.h.b16 %v114
    %v437 = vunpack.c.l.b16 %v115
    %v438 = vunpack.c.h.b16 %v115
    %v439 = vunpack.c.l.b16 %v116
    %v440 = vunpack.c.h.b16 %v116
    %v441 = vunpack.c.l.b16 %v117
    %v442 = vunpack.c.h.b16 %v117
    %v443 = vunpack.c.l.b16 %v118
    %v444 = vunpack.c.h.b16 %v118
    %v445 = vunpack.c.l.b16 %v119
    %v446 = vunpack.c.h.b16 %v119
    %v447 = vunpack.c.l.b16 %v120
    %v448 = vunpack.c.h.b16 %v120
    %v449 = vunpack.c.l.b16 %v121
    %v450 = vunpack.c.h.b16 %v121
    %v451 = vunpack.c.l.b16 %v122
    %v452 = vunpack.c.h.b16 %v122
    %v453 = vunpack.c.l.b16 %v123
    %v454 = vunpack.c.h.b16 %v123
    %v455 = vunpack.c.l.b16 %v124
    %v456 = vunpack.c.h.b16 %v124
    %v457 = vunpack.c.l.b16 %v125
    %v458 = vunpack.c.h.b16 %v125
    %v459 = vunpack.c.l.b16 %v126
    %v460 = vunpack.c.h.b16 %v126
    %v461 = vunpack.c.l.b16 %v127
    %v462 = vunpack.c.h.b16 %v127
    %v463 = vunpack.c.l.b16 %v128
    %v464 = vunpack.c.h.b16 %v128
    %v465 = vunpack.c.l.b16 %v129
    %v466 = vunpack.c.h.b16 %v129
    %v467 = vunpack.c.l.b16 %v130
    %v468 = vunpack.c.h.b16 %v130
    %v469 = vunpack.c.l.b16 %v131
    %v470 = vunpack.c.h.b16 %v131
    %v471 = vunpack.c.l.b16 %v132
    %v472 = vunpack.c.h.b16 %v132
    %v473 = vunpack.c.l.b16 %v133
    %v474 = vunpack.c.h.b16 %v133
    %v475 = vunpack.c.l.b16 %v134
    %v476 = vunpack.c.h.b16 %v134
    %v477 = vunpack.c.l.b16 %v135
    %v478 = vunpack.c.h.b16 %v135
    %v479 = vunpack.c.l.b16 %v136
    %v480 = vunpack.c.h.b16 %v136
    %v481 = vunpack.c.l.b16 %v137
    %v482 = vunpack.c.h.b16 %v137
    %v483 = vunpack.c.l.b16 %v138
    %v484 = vunpack.c.h.b16 %v138
    %v485 = vunpack.c.l.b16 %v139
    %v486 = vunpack.c.h.b16 %v139
    %v487 = vunpack.c.l.b16 %v140
    %v488 = vunpack.c.h.b16 %v140
    %v489 = vunpack.c.l.b16 %v141
    %v490 = vunpack.c.h.b16 %v141
    %v491 = vunpack.c.l.b16 %v142
    %v492 = vunpack.c.h.b16 %v142
    %v493 = vunpack.c.l.b16 %v143
    %v494 = vunpack.c.h.b16 %v143
    %v495 = vunpack.c.l.b16 %v144
    %v496 = vunpack.c.h.b16 %v144
    %v497 = vunpack.c.l.b16 %v145
    %v498 = vunpack.c.h.b16 %v145
    %v499 = vunpack.c.l.b16 %v146
    %v500 = vunpack.c.h.b16 %v146
    %v501 = vunpack.c.l.b16 %v147
    %v502 = vunpack.c.h.b16 %v147
    %v503 = vunpack.c.l.b16 %v148
    %v504 = vunpack.c.h.b16 %v148
    %v505 = vunpack.c.l.b16 %v149
    %v506 = vunpack.c.h.b16 %v149
    %v507 = vunpack.c.l.b16 %v150
    %v508 = vunpack.c.h.b16 %v150
    %v509 = vunpack.c.l.b16 %v151
    %v510 = vunpack.c.h.b16 %v151
    %v511 = vunpack.c.l.b16 %v152
    %v512 = vunpack.c.h.b16 %v152
    %v513 = vunpack.c.l.b16 %v153
    %v514 = vunpack.c.h.b16 %v153
    %v515 = vunpack.c.l.b16 %v154
    %v516 = vunpack.c.h.b16 %v154
    %v517 = vunpack.c.l.b16 %v155
    %v518 = vunpack.c.h.b16 %v155
    %v519 = vunpack.c.l.b16 %v156
    %v520 = vunpack.c.h.b16 %v156
    %v521 = vunpack.c.l.b16 %v157
    %v522 = vunpack.c.h.b16 %v157
    %v523 = vunpack.c.l.b16 %v158
    %v524 = vunpack.c.h.b16 %v158
    %v525 = vunpack.c.l.b16 %v159
    %v526 = vunpack.c.h.b16 %v159
    %v527 = vpack.c.b16 %v305, %v303
    %v528 = vpack.c.b16 %v306, %v304
    %v529 = vpack.c.b16 %v309, %v307
    %v530 = vpack.c.b16 %v310, %v308
    %v531 = vpack.c.b16 %v313, %v311
    %v532 = vpack.c.b16 %v314, %v312
    %v533 = vpack.c.b16 %v317, %v315
    %v534 = vpack.c.b16 %v318, %v316
    %v535 = vpack.c.b16 %v321, %v319
    %v536 = vpack.c.b16 %v322, %v320
    %v537 = vpack.c.b16 %v325, %v323
    %v538 = vpack.c.b16 %v326, %v324
    %v539 = vpack.c.b16 %v329, %v327
    %v540 = vpack.c.b16 %v330, %v328
    %v541 = vpack.c.b16 %v333, %v331
    %v542 = vpack.c.b16 %v334, %v332
    %v543 = vpack.c.b16 %v337, %v335
    %v544 = vpack.c.b16 %v338, %v336
    %v545 = vpack.c.b16 %v341, %v339
    %v546 = vpack.c.b16 %v342, %v340
    %v547 = vpack.c.b16 %v345, %v343
    %v548 = vpack.c.b16 %v346, %v344
    %v549 = vpack.c.b16 %v349, %v347
    %v550 = vpack.c.b16 %v350, %v348
    %v551 = vpack.c.b16 %v353, %v351
    %v552 = vpack.c.b16 %v354, %v352
    %v553 = vpack.c.b16 %v357, %v355
    %v554 = vpack.c.b16 %v358, %v356
    %v555 = vpack.c.b16 %v361, %v359
    %v556 = vpack.c.b16 %v362, %v360
    %v557 = vpack.c.b16 %v365, %v363
    %v558 = vpack.c.b16 %v366, %v364
    %v559 = vpack.c.b16 %v369, %v367
    %v560 = vpack.c.b16 %v370, %v368
    %v561 = vpack.c.b16 %v373, %v371
    %v562 = vpack.c.b16 %v374, %v372
    %v563 = vpack.c.b16 %v377, %v375
    %v564 = vpack.c.b16 %v378, %v376
    %v565 = vpack.c.b16 %v381, %v379
    %v566 = vpack.c.b16 %v382, %v380
    %v567 = vpack.c.b16 %v385, %v383
    %v568 = vpack.c.b16 %v386, %v384
    %v569 = vpack.c.b16 %v389, %v387
    %v570 = vpack.c.b16 %v390, %v388
    %v571 = vpack.c.b16 %v393, %v391
    %v572 = vpack.c.b16 %v394, %v392
    %v573 = vpack.c.b16 %v397, %v395
    %v574 = vpack.c.b16 %v398, %v396
    %v575 = vpack.c.b16 %v401, %v399
    %v576 = vpack.c.b16 %v402, %v400
    %v577 = vpack.c.b16 %v405, %v403
    %v578 = vpack.c.b16 %v406, %v404
    %v579 = vpack.c.b16 %v409, %v407
    %v580 = vpack.c.b16 %v410, %v408
    %v581 = vpack.c.b16 %v413, %v411
    %v582 = vpack.c.b16 %v414, %v412
    %v583 = vpack.c.b16 %v417, %v415
    %v584 = vpack.c.b16 %v418, %v416
    %v585 = vpack.c.b16 %v421, %v419
    %v586 = vpack.c.b16 %v422, %v420
    %v587 = vpack.c.b16 %v425, %v423
    %v588 = vpack.c.b16 %v426, %v424
    %v589 = vpack.c.b16 %v429, %v427
    %v590 = vpack.c.b16 %v430, %v428
    %v591 = vpack.c.b16 %v433, %v431
    %v592 = vpack.c.b16 %v434, %v432
    %v593 = vpack.c.b16 %v437, %v435
    %v594 = vpack.c.b16 %v438, %v436
    %v595 = vpack.c.b16 %v441, %v439
    %v596 = vpack.c.b16 %v442, %v440
    %v597 = vpack.c.b16 %v445, %v443
    %v598 = vpack.c.b16 %v446, %v444
    %v599 = vpack.c.b16 %v449, %v447
    %v600 = vpack.c.b16 %v450, %v448
    %v601 = vpack.c.b16 %v453, %v451
    %v602 = vpack.c.b16 %v454, %v452
    %v603 = vpack.c.b16 %v457, %v455
    %v604 = vpack.c.b16 %v458, %v456
    %v605 = vpack.c.b16 %v461, %v459
    %v606 = vpack.c.b16 %v462, %v460
    %v607 = vpack.c.b16 %v465, %v463
    %v608 = vpack.c.b16 %v466, %v464
    %v609 = vpack.c.b16 %v469, %v467
    %v610 = vpack.c.b16 %v470, %v468
    %v611 = vpack.c.b16 %v473, %v471
    %v612 = vpack.c.b16 %v474, %v472
    %v613 = vpack.c.b16 %v477, %v475
    %v614 = vpack.c.b16 %v478, %v476
    %v615 = vpack.c.b16 %v481, %v479
    %v616 = vpack.c.b16 %v482, %v480
    %v617 = vpack.c.b16 %v485, %v483
    %v618 = vpack.c.b16 %v486, %v484
    %v619 = vpack.c.b16 %v489, %v487
    %v620 = vpack.c.b16 %v490, %v488
    %v621 = vpack.c.b16 %v493, %v491
    %v622 = vpack.c.b16 %v494, %v492
    %v623 = vpack.c.b16 %v497, %v495
    %v624 = vpack.c.b16 %v498, %v496
    %v625 = vpack.c.b16 %v501, %v499
    %v626 = vpack.c.b16 %v502, %v500
    %v627 = vpack.c.b16 %v505, %v503
    %v628 = vpack.c.b16 %v506, %v504
    %v629 = vpack.c.b16 %v509, %v507
    %v630 = vpack.c.b16 %v510, %v508
    %v631 = vpack.c.b16 %v513, %v511
    %v632 = vpack.c.b16 %v514, %v512
    %v633 = vpack.c.b16 %v517, %v515
    %v634 = vpack.c.b16 %v518, %v516
    %v635 = vpack.c.b16 %v521, %v519
    %v636 = vpack.c.b16 %v522, %v520
    %v637 = vpack.c.b16 %v525, %v523
    %v638 = vpack.c.b16 %v526, %v524
    %751 = vmatpush.bf16.msra.mxu0 %v541
    %752 = vmatpush.bf16.msra.mxu0 %v539
    %753 = vmatpush.bf16.msra.mxu0 %v537
    %754 = vmatpush.bf16.msra.mxu0 %v535
    %755 = vmatpush.bf16.msra.mxu0 %v533
    %756 = vmatpush.bf16.msra.mxu0 %v531
    %757 = vmatpush.bf16.msra.mxu0 %v529
    %758 = vmatpush.bf16.msra.mxu0 %v527
    %759 = vmatmul.bf16.gmra.mxu0 %v177
    %v760 = vpop.f32.mrf.mxu0
    %v761 = vadd.f32 %v162, %v760
    %v762 = vpop.f32.mrf.mxu0
    %763 = vdwg.mxu0
    %764 = vmatpush.bf16.msra.mxu0 %v557
    %765 = vmatpush.bf16.msra.mxu0 %v555
    %766 = vmatpush.bf16.msra.mxu0 %v553
    %767 = vmatpush.bf16.msra.mxu0 %v551
    %768 = vmatpush.bf16.msra.mxu0 %v549
    %769 = vmatpush.bf16.msra.mxu0 %v547
    %770 = vmatpush.bf16.msra.mxu0 %v545
    %771 = vmatpush.bf16.msra.mxu0 %v543
    %772 = vmatmul.bf16.gmra.mxu0 %v178
    %v773 = vpop.f32.mrf.mxu0
    %v774 = vadd.f32 %v761, %v773
    %v775 = vpop.f32.mrf.mxu0
    %776 = vdwg.mxu0
    %777 = vmatpush.bf16.msra.mxu0 %v573
    %778 = vmatpush.bf16.msra.mxu0 %v571
    %779 = vmatpush.bf16.msra.mxu0 %v569
    %780 = vmatpush.bf16.msra.mxu0 %v567
    %781 = vmatpush.bf16.msra.mxu0 %v565
    %782 = vmatpush.bf16.msra.mxu0 %v563
    %783 = vmatpush.bf16.msra.mxu0 %v561
    %784 = vmatpush.bf16.msra.mxu0 %v559
    %785 = vmatmul.bf16.gmra.mxu0 %v179
    %v786 = vpop.f32.mrf.mxu0
    %v787 = vadd.f32 %v774, %v786
    %v788 = vpop.f32.mrf.mxu0
    %789 = vdwg.mxu0
    %790 = vmatpush.bf16.msra.mxu0 %v589
    %791 = vmatpush.bf16.msra.mxu0 %v587
    %792 = vmatpush.bf16.msra.mxu0 %v585
    %793 = vmatpush.bf16.msra.mxu0 %v583
    %794 = vmatpush.bf16.msra.mxu0 %v581
    %795 = vmatpush.bf16.msra.mxu0 %v579
    %796 = vmatpush.bf16.msra.mxu0 %v577
    %797 = vmatpush.bf16.msra.mxu0 %v575
    %798 = vmatmul.bf16.gmra.mxu0 %v180
    %v799 = vpop.f32.mrf.mxu0
    %v800 = vadd.f32 %v787, %v799
    %v801 = vpop.f32.mrf.mxu0
    %802 = vdwg.mxu0
    %803 = vmatpush.bf16.msra.mxu0 %v605
    %804 = vmatpush.bf16.msra.mxu0 %v603
    %805 = vmatpush.bf16.msra.mxu0 %v601
    %806 = vmatpush.bf16.msra.mxu0 %v599
    %807 = vmatpush.bf16.msra.mxu0 %v597
    %808 = vmatpush.bf16.msra.mxu0 %v595
    %809 = vmatpush.bf16.msra.mxu0 %v593
    %810 = vmatpush.bf16.msra.mxu0 %v591
    %811 = vmatmul.bf16.gmra.mxu0 %v181
    %v812 = vpop.f32.mrf.mxu0
    %v813 = vadd.f32 %v800, %v812
    %v814 = vpop.f32.mrf.mxu0
    %815 = vdwg.mxu0
    %816 = vmatpush.bf16.msra.mxu0 %v621
    %817 = vmatpush.bf16.msra.mxu0 %v619
    %818 = vmatpush.bf16.msra.mxu0 %v617
    %819 = vmatpush.bf16.msra.mxu0 %v615
    %820 = vmatpush.bf16.msra.mxu0 %v613
    %821 = vmatpush.bf16.msra.mxu0 %v611
    %822 = vmatpush.bf16.msra.mxu0 %v609
    %823 = vmatpush.bf16.msra.mxu0 %v607
    %824 = vmatmul.bf16.gmra.mxu0 %v182
    %v825 = vpop.f32.mrf.mxu0
    %v826 = vadd.f32 %v813, %v825
    %v827 = vpop.f32.mrf.mxu0
    %828 = vdwg.mxu0
    %829 = vmatpush.bf16.msra.mxu0 %v637
    %830 = vmatpush.bf16.msra.mxu0 %v635
    %831 = vmatpush.bf16.msra.mxu0 %v633
    %832 = vmatpush.bf16.msra.mxu0 %v631
    %833 = vmatpush.bf16.msra.mxu0 %v629
    %834 = vmatpush.bf16.msra.mxu0 %v627
    %835 = vmatpush.bf16.msra.mxu0 %v625
    %836 = vmatpush.bf16.msra.mxu0 %v623
    %837 = vmatmul.bf16.gmra.mxu0 %v183
    %v838 = vpop.f32.mrf.mxu0
    %v839 = vadd.f32 %v826, %v838
    %v840 = vpop.f32.mrf.mxu0
    %841 = vdwg.mxu0
    %842 = vmatpush.bf16.msra.mxu0 %v542
    %843 = vmatpush.bf16.msra.mxu0 %v540
    %844 = vmatpush.bf16.msra.mxu0 %v538
    %845 = vmatpush.bf16.msra.mxu0 %v536
    %846 = vmatpush.bf16.msra.mxu0 %v534
    %847 = vmatpush.bf16.msra.mxu0 %v532
    %848 = vmatpush.bf16.msra.mxu0 %v530
    %849 = vmatpush.bf16.msra.mxu0 %v528
    %850 = vmatmul.bf16.gmra.mxu0 %v177
    %v851 = vpop.f32.mrf.mxu0
    %v852 = vadd.f32 %v163, %v851
    %v853 = vpop.f32.mrf.mxu0
    %854 = vdwg.mxu0
    %855 = vmatpush.bf16.msra.mxu0 %v558
    %856 = vmatpush.bf16.msra.mxu0 %v556
    %857 = vmatpush.bf16.msra.mxu0 %v554
    %858 = vmatpush.bf16.msra.mxu0 %v552
    %859 = vmatpush.bf16.msra.mxu0 %v550
    %860 = vmatpush.bf16.msra.mxu0 %v548
    %861 = vmatpush.bf16.msra.mxu0 %v546
    %862 = vmatpush.bf16.msra.mxu0 %v544
    %863 = vmatmul.bf16.gmra.mxu0 %v178
    %v864 = vpop.f32.mrf.mxu0
    %v865 = vadd.f32 %v852, %v864
    %v866 = vpop.f32.mrf.mxu0
    %867 = vdwg.mxu0
    %868 = vmatpush.bf16.msra.mxu0 %v574
    %869 = vmatpush.bf16.msra.mxu0 %v572
    %870 = vmatpush.bf16.msra.mxu0 %v570
    %871 = vmatpush.bf16.msra.mxu0 %v568
    %872 = vmatpush.bf16.msra.mxu0 %v566
    %873 = vmatpush.bf16.msra.mxu0 %v564
    %874 = vmatpush.bf16.msra.mxu0 %v562
    %875 = vmatpush.bf16.msra.mxu0 %v560
    %876 = vmatmul.bf16.gmra.mxu0 %v179
    %v877 = vpop.f32.mrf.mxu0
    %v878 = vadd.f32 %v865, %v877
    %v879 = vpop.f32.mrf.mxu0
    %880 = vdwg.mxu0
    %881 = vmatpush.bf16.msra.mxu0 %v590
    %882 = vmatpush.bf16.msra.mxu0 %v588
    %883 = vmatpush.bf16.msra.mxu0 %v586
    %884 = vmatpush.bf16.msra.mxu0 %v584
    %885 = vmatpush.bf16.msra.mxu0 %v582
    %886 = vmatpush.bf16.msra.mxu0 %v580
    %887 = vmatpush.bf16.msra.mxu0 %v578
    %888 = vmatpush.bf16.msra.mxu0 %v576
    %889 = vmatmul.bf16.gmra.mxu0 %v180
    %v890 = vpop.f32.mrf.mxu0
    %v891 = vadd.f32 %v878, %v890
    %v892 = vpop.f32.mrf.mxu0
    %893 = vdwg.mxu0
    %894 = vmatpush.bf16.msra.mxu0 %v606
    %895 = vmatpush.bf16.msra.mxu0 %v604
    %896 = vmatpush.bf16.msra.mxu0 %v602
    %897 = vmatpush.bf16.msra.mxu0 %v600
    %898 = vmatpush.bf16.msra.mxu0 %v598
    %899 = vmatpush.bf16.msra.mxu0 %v596
    %900 = vmatpush.bf16.msra.mxu0 %v594
    %901 = vmatpush.bf16.msra.mxu0 %v592
    %902 = vmatmul.bf16.gmra.mxu0 %v181
    %v903 = vpop.f32.mrf.mxu0
    %v904 = vadd.f32 %v891, %v903
    %v905 = vpop.f32.mrf.mxu0
    %906 = vdwg.mxu0
    %907 = vmatpush.bf16.msra.mxu0 %v622
    %908 = vmatpush.bf16.msra.mxu0 %v620
    %909 = vmatpush.bf16.msra.mxu0 %v618
    %910 = vmatpush.bf16.msra.mxu0 %v616
    %911 = vmatpush.bf16.msra.mxu0 %v614
    %912 = vmatpush.bf16.msra.mxu0 %v612
    %913 = vmatpush.bf16.msra.mxu0 %v610
    %914 = vmatpush.bf16.msra.mxu0 %v608
    %915 = vmatmul.bf16.gmra.mxu0 %v182
    %v916 = vpop.f32.mrf.mxu0
    %v917 = vadd.f32 %v904, %v916
    %v918 = vpop.f32.mrf.mxu0
    %919 = vdwg.mxu0
    %920 = vmatpush.bf16.msra.mxu0 %v638
    %921 = vmatpush.bf16.msra.mxu0 %v636
    %922 = vmatpush.bf16.msra.mxu0 %v634
    %923 = vmatpush.bf16.msra.mxu0 %v632
    %924 = vmatpush.bf16.msra.mxu0 %v630
    %925 = vmatpush.bf16.msra.mxu0 %v628
    %926 = vmatpush.bf16.msra.mxu0 %v626
    %927 = vmatpush.bf16.msra.mxu0 %v624
    %928 = vmatmul.bf16.gmra.mxu0 %v183
    %v929 = vpop.f32.mrf.mxu0
    %v930 = vadd.f32 %v917, %v929
    %v931 = vpop.f32.mrf.mxu0
    %932 = vdwg.mxu0
    %v933 = vmax.f32 %v839, 0.0
    %v934 = vmax.f32 %v930, 0.0
    %v935 = vpack.c.bf16 %v933, %v933
    %v936 = vpack.c.bf16 %v934, %v934
    %v937 = vld [vmem:[%s3] sm:$0xf]
    %v938 = vld [vmem:[%s3 + $0x4] sm:$0xf]
    %v939 = vld [vmem:[%s3 + $0x8] sm:$0xf]
    %v940 = vld [vmem:[%s3 + $0xc] sm:$0xf]
    %v941 = vld [vmem:[%s3 + $0x10] sm:$0xf]
    %v942 = vld [vmem:[%s3 + $0x14] sm:$0xf]
    %v943 = vld [vmem:[%s3 + $0x18] sm:$0xf]
    %v944 = vld [vmem:[%s3 + $0x1c] sm:$0xf]
    %v945 = vld [vmem:[%s3 + $0x20] sm:$0xf]
    %v946 = vld [vmem:[%s3 + $0x24] sm:$0xf]
    %v947 = vld [vmem:[%s3 + $0x28] sm:$0xf]
    %v948 = vld [vmem:[%s3 + $0x2c] sm:$0xf]
    %v949 = vld [vmem:[%s3 + $0x30] sm:$0xf]
    %v950 = vld [vmem:[%s3 + $0x34] sm:$0xf]
    %v951 = vld [vmem:[%s3 + $0x38] sm:$0xf]
    %v952 = vld [vmem:[%s3 + $0x3c] sm:$0xf]
    %v953 = vld [vmem:[%s3 + $0x40] sm:$0xf]
    %v954 = vld [vmem:[%s3 + $0x44] sm:$0xf]
    %v955 = vld [vmem:[%s3 + $0x48] sm:$0xf]
    %v956 = vld [vmem:[%s3 + $0x4c] sm:$0xf]
    %v957 = vld [vmem:[%s3 + $0x50] sm:$0xf]
    %v958 = vld [vmem:[%s3 + $0x54] sm:$0xf]
    %v959 = vld [vmem:[%s3 + $0x58] sm:$0xf]
    %v960 = vld [vmem:[%s3 + $0x5c] sm:$0xf]
    %v961 = vld [vmem:[%s3 + $0x60] sm:$0xf]
    %v962 = vld [vmem:[%s3 + $0x64] sm:$0xf]
    %v963 = vld [vmem:[%s3 + $0x68] sm:$0xf]
    %v964 = vld [vmem:[%s3 + $0x6c] sm:$0xf]
    %v965 = vld [vmem:[%s3 + $0x70] sm:$0xf]
    %v966 = vld [vmem:[%s3 + $0x74] sm:$0xf]
    %v967 = vld [vmem:[%s3 + $0x78] sm:$0xf]
    %v968 = vld [vmem:[%s3 + $0x7c] sm:$0xf]
    %v969 = vld [vmem:[%s4] sm:$0x1]
    %v971 = vperm.slane %v969, 0
    %v1005 = vunpack.c.l.b16 %v937
    %v1006 = vunpack.c.l.b16 %v938
    %v1007 = vunpack.c.l.b16 %v939
    %v1008 = vunpack.c.l.b16 %v940
    %v1009 = vunpack.c.l.b16 %v941
    %v1010 = vunpack.c.l.b16 %v942
    %v1011 = vunpack.c.l.b16 %v943
    %v1012 = vunpack.c.l.b16 %v944
    %v1013 = vunpack.c.l.b16 %v945
    %v1014 = vunpack.c.l.b16 %v946
    %v1015 = vunpack.c.l.b16 %v947
    %v1016 = vunpack.c.l.b16 %v948
    %v1017 = vunpack.c.l.b16 %v949
    %v1018 = vunpack.c.l.b16 %v950
    %v1019 = vunpack.c.l.b16 %v951
    %v1020 = vunpack.c.l.b16 %v952
    %v1021 = vunpack.c.l.b16 %v953
    %v1022 = vunpack.c.l.b16 %v954
    %v1023 = vunpack.c.l.b16 %v955
    %v1024 = vunpack.c.l.b16 %v956
    %v1025 = vunpack.c.l.b16 %v957
    %v1026 = vunpack.c.l.b16 %v958
    %v1027 = vunpack.c.l.b16 %v959
    %v1028 = vunpack.c.l.b16 %v960
    %v1029 = vunpack.c.l.b16 %v961
    %v1030 = vunpack.c.l.b16 %v962
    %v1031 = vunpack.c.l.b16 %v963
    %v1032 = vunpack.c.l.b16 %v964
    %v1033 = vunpack.c.l.b16 %v965
    %v1034 = vunpack.c.l.b16 %v966
    %v1035 = vunpack.c.l.b16 %v967
    %v1036 = vunpack.c.l.b16 %v968
    %v1037 = vpack.c.b16 %v1006, %v1005
    %v1038 = vpack.c.b16 %v1008, %v1007
    %v1039 = vpack.c.b16 %v1010, %v1009
    %v1040 = vpack.c.b16 %v1012, %v1011
    %v1041 = vpack.c.b16 %v1014, %v1013
    %v1042 = vpack.c.b16 %v1016, %v1015
    %v1043 = vpack.c.b16 %v1018, %v1017
    %v1044 = vpack.c.b16 %v1020, %v1019
    %v1045 = vpack.c.b16 %v1022, %v1021
    %v1046 = vpack.c.b16 %v1024, %v1023
    %v1047 = vpack.c.b16 %v1026, %v1025
    %v1048 = vpack.c.b16 %v1028, %v1027
    %v1049 = vpack.c.b16 %v1030, %v1029
    %v1050 = vpack.c.b16 %v1032, %v1031
    %v1051 = vpack.c.b16 %v1034, %v1033
    %v1052 = vpack.c.b16 %v1036, %v1035
    %1069 = vmatpush.bf16.msra.mxu0 %v1044
    %1070 = vmatpush.bf16.msra.mxu0 %v1043
    %1071 = vmatpush.bf16.msra.mxu0 %v1042
    %1072 = vmatpush.bf16.msra.mxu0 %v1041
    %1073 = vmatpush.bf16.msra.mxu0 %v1040
    %1074 = vmatpush.bf16.msra.mxu0 %v1039
    %1075 = vmatpush.bf16.msra.mxu0 %v1038
    %1076 = vmatpush.bf16.msra.mxu0 %v1037
    %1077 = vmatmul.bf16.gmra.mxu0 %v935
    %v1078 = vpop.f32.mrf.mxu0
    %v1079 = vadd.f32 %v971, %v1078
    %v1080 = vpop.f32.mrf.mxu0
    %1081 = vdwg.mxu0
    %1082 = vmatpush.bf16.msra.mxu0 %v1052
    %1083 = vmatpush.bf16.msra.mxu0 %v1051
    %1084 = vmatpush.bf16.msra.mxu0 %v1050
    %1085 = vmatpush.bf16.msra.mxu0 %v1049
    %1086 = vmatpush.bf16.msra.mxu0 %v1048
    %1087 = vmatpush.bf16.msra.mxu0 %v1047
    %1088 = vmatpush.bf16.msra.mxu0 %v1046
    %1089 = vmatpush.bf16.msra.mxu0 %v1045
    %1090 = vmatmul.bf16.gmra.mxu0 %v936
    %v1091 = vpop.f32.mrf.mxu0
    %v1092 = vadd.f32 %v1079, %v1091
    %v1093 = vpop.f32.mrf.mxu0
    %1094 = vdwg.mxu0
    %v1095 = vmax.f32 %v1092, 0.0
    %v1096 = vpack.c.bf16 %v1095, %v1095
    %v1097 = vld [vmem:[%s5] sm:$0xf]
    %v1098 = vld [vmem:[%s5 + $0x4] sm:$0xf]
    %v1099 = vld [vmem:[%s5 + $0x8] sm:$0xf]
    %v1100 = vld [vmem:[%s5 + $0xc] sm:$0xf]
    %v1101 = vld [vmem:[%s5 + $0x10] sm:$0xf]
    %v1102 = vld [vmem:[%s5 + $0x14] sm:$0xf]
    %v1103 = vld [vmem:[%s5 + $0x18] sm:$0xf]
    %v1104 = vld [vmem:[%s5 + $0x1c] sm:$0xf]
    %v1105 = vld [vmem:[%s6] sm:$0x1]
    %v1107 = vperm.slane %v1105, 0
    %v1117 = vunpack.c.l.b16 %v1097
    %v1118 = vunpack.c.l.b16 %v1098
    %v1119 = vunpack.c.l.b16 %v1099
    %v1120 = vunpack.c.l.b16 %v1100
    %v1121 = vunpack.c.l.b16 %v1101
    %v1122 = vunpack.c.l.b16 %v1102
    %v1123 = vunpack.c.l.b16 %v1103
    %v1124 = vunpack.c.l.b16 %v1104
    %v1125 = vpack.c.b16 %v1118, %v1117
    %v1126 = vpack.c.b16 %v1120, %v1119
    %v1127 = vpack.c.b16 %v1122, %v1121
    %v1128 = vpack.c.b16 %v1124, %v1123
    %vm1133 = vcmask 523264
    %v1135 = vsel %vm1133, %v1096, 0
    %1137 = vmatpush.bf16.msra.mxu0 0
    %1138 = vmatpush.bf16.msra.mxu0 0
    %1139 = vmatpush.bf16.msra.mxu0 0
    %1140 = vmatpush.bf16.msra.mxu0 0
    %1141 = vmatpush.bf16.msra.mxu0 %v1128
    %1142 = vmatpush.bf16.msra.mxu0 %v1127
    %1143 = vmatpush.bf16.msra.mxu0 %v1126
    %1144 = vmatpush.bf16.msra.mxu0 %v1125
    %1145 = vmatmul.bf16.gmra.mxu0 %v1135
    %v1146 = vpop.f32.mrf.mxu0
    %v1147 = vadd.f32 %v1107, %v1146
    %v1148 = vpop.f32.mrf.mxu0
    %1149 = vdwg.mxu0
    %vm1150 = vcmask 261120
    %1151 = vst.msk [vmem:[#allocation5] sm:$0xff] %vm1150, %v1147
    // Predicated region
    $region34: #{tpu_custom_call.1} parent=1 // pred_check
      _
    $region35: #{tpu_custom_call.1} parent=1 // pred_check_branch
      %1153 = sbr.rel (0) target = $region37
    $region36: #{tpu_custom_call.1} parent=1 // pred_region
      %1155 = vsyncadd [#allocation4], 0
      %s1157 = sshll.u32 [#allocation5], 4
      %s1158 = int_to_ptr.vmem [resolvable:$true] %s1157
      %s1159 = sshll.u32 %s7, 4
      %s1160 = int_to_ptr.hbm [resolvable:$true] %s1159
      %1162 = dma.vmem_to_hbm [thread:$0]  %s1158, 128, %s1160, [#allocation4]
    $region37: #{tpu_custom_call.1} parent=1 // pred_fallthru
      _
    // Predicated region
    $region38: #{tpu_custom_call.1} parent=1 // pred_check
      _
    $region39: #{tpu_custom_call.1} parent=1 // pred_check_branch
      %1164 = sbr.rel (0) target = $region41
    $region40: #{tpu_custom_call.1} parent=1 // pred_region
      %1166 = dma.done [#allocation4], 128
    $region41: #{tpu_custom_call.1} parent=1 // pred_fallthru
      _
    %1167 = vsyncpa [#allocation3], 1
    %1168 = vsyncpa [#allocation4], 1

</llo_original>
